<compile_context>
chip_gen: v6e
topology: v6e:2x2x1
jax: 0.10.0
libtpu: 0.0.40
codegen_flags: <defaults>
</compile_context>

<pallas_src>
import functools

import jax
import jax.numpy as jnp
from jax.experimental import pallas as pl
from jax.experimental.pallas import tpu as pltpu

_VMEM_BUDGET_BYTES = 64 * 1024 * 1024   # safe on v5e/v6e/v7x


def _attn_output_kernel(ctx_ref, w_ref, b_ref, inp_ref, gamma_ref, beta_ref,
                        out_ref, acc_ref, *, eps):
    # ctx_ref:   (tile_r, tile_k)   activations (native dtype)
    # w_ref:     (D, tile_k)        nn.Linear weight block (out x in layout)
    # b_ref, gamma_ref, beta_ref: (1, D)
    # inp_ref, out_ref: (tile_r, D)
    # acc_ref:   (tile_r, D) fp32 accumulator scratch
    k = pl.program_id(1)
    nk = pl.num_programs(1)

    @pl.when(k == 0)
    def _():
        acc_ref[...] = jnp.zeros_like(acc_ref)

    # Matmul on the MXU in the native dtype, fp32 accumulation.
    # Contracting dim 1 of both operands == x @ W^T (nn.Linear convention).
    acc_ref[...] += jax.lax.dot_general(
        ctx_ref[...], w_ref[...],
        dimension_numbers=(((1,), (1,)), ((), ())),
        preferred_element_type=jnp.float32)

    @pl.when(k == nk - 1)
    def _():
        # Dropout (eval mode => identity) + bias folded into the residual add.
        # TODO(synk): training-mode dropout (random mask) not implemented;
        # eval semantics (identity) match model.eval() inference.
        y = acc_ref[...] + (b_ref[...].astype(jnp.float32)
                            + inp_ref[...].astype(jnp.float32))

        # Post LayerNorm over the last (d_model) axis, fp32 math.
        mean = jnp.mean(y, axis=-1, keepdims=True)
        centered = y - mean
        var = jnp.mean(centered * centered, axis=-1, keepdims=True)
        normed = centered * jax.lax.rsqrt(var + eps)
        normed = (normed * gamma_ref[...].astype(jnp.float32)
                  + beta_ref[...].astype(jnp.float32))

        out_ref[...] = normed.astype(out_ref.dtype)


def _round_up(x, m):
    return ((x + m - 1) // m) * m


def _pick_tile_k(d_model, itemsize):
    """Full-D contraction unless the double-buffered weight block would blow
    the VMEM budget (large d_model on v7x); then tile K in weight-dividing
    chunks so ragged K blocks never feed garbage into the accumulator."""
    tk = d_model
    while (tk % 2 == 0 and (tk // 2) % 128 == 0 and tk > 512
           and 2 * d_model * tk * itemsize > _VMEM_BUDGET_BYTES // 4):
        tk //= 2
    return tk


def attention_output(context, input_tensor, weight, bias, gamma, beta,
                     *, eps=1e-12, tile_rows=256, tile_k=None):
    """Fused Linear + residual add + post-LayerNorm.

    Args:
      context:      (B, S, D) attention output
      input_tensor: (B, S, D) residual input
      weight:       (D, D) nn.Linear weight (PyTorch convention: out x in)
      bias:         (D,)   nn.Linear bias
      gamma, beta:  (D,)   LayerNorm affine params
    """
    B, S, D = context.shape
    rows = B * S

    ctx2 = context.reshape(rows, D)
    inp2 = input_tensor.reshape(rows, D)
    b2 = bias.reshape(1, D)
    g2 = gamma.reshape(1, D)
    be2 = beta.reshape(1, D)

    # Row tile: big (MXU-friendly), multiple of 8 sublanes, clamped to the
    # problem size; ragged last tile is handled by the cdiv grid.
    tile_r = min(max(8, (tile_rows // 8) * 8), _round_up(rows, 8))

    if tile_k is None:
        tile_k = _pick_tile_k(D, jnp.dtype(weight.dtype).itemsize)
    assert D % tile_k == 0, "tile_k must divide d_model"

    grid = (pl.cdiv(rows, tile_r), D // tile_k)

    out = pl.pallas_call(
        functools.partial(_attn_output_kernel, eps=eps),
        out_shape=jax.ShapeDtypeStruct((rows, D), context.dtype),
        grid_spec=pltpu.PrefetchScalarGridSpec(
            num_scalar_prefetch=0,
            grid=grid,
            in_specs=[
                pl.BlockSpec((tile_r, tile_k), lambda i, k: (i, k)),  # context
                pl.BlockSpec((D, tile_k), lambda i, k: (0, k)),       # weight
                pl.BlockSpec((1, D), lambda i, k: (0, 0)),            # bias
                pl.BlockSpec((tile_r, D), lambda i, k: (i, 0)),       # residual
                pl.BlockSpec((1, D), lambda i, k: (0, 0)),            # ln gamma
                pl.BlockSpec((1, D), lambda i, k: (0, 0)),            # ln beta
            ],
            out_specs=pl.BlockSpec((tile_r, D), lambda i, k: (i, 0)),
            scratch_shapes=[pltpu.VMEM((tile_r, D), jnp.float32)],
        ),
        compiler_params=pltpu.CompilerParams(
            dimension_semantics=("parallel", "arbitrary"),
            vmem_limit_bytes=_VMEM_BUDGET_BYTES),
    )(ctx2, weight, b2, inp2, g2, be2)

    return out.reshape(B, S, D)


def _reference(context, input_tensor, weight, bias, gamma, beta, eps=1e-12):
    y = jnp.einsum("bsd,od->bso", context, weight) + bias
    y = y + input_tensor
    mean = jnp.mean(y, axis=-1, keepdims=True)
    var = jnp.mean((y - mean) ** 2, axis=-1, keepdims=True)
    return (y - mean) * jax.lax.rsqrt(var + eps) * gamma + beta


if __name__ == "__main__":
    B, S, D = 2, 8, 32          # batch, seq, d_model
    eps = 1e-12

    key = jax.random.PRNGKey(0)
    k_ctx, k_inp, k_w, k_b = jax.random.split(key, 4)

    context = jax.random.normal(k_ctx, (B, S, D), dtype=jnp.float32)
    input_tensor = jax.random.normal(k_inp, (B, S, D), dtype=jnp.float32)

    # Deterministic parameter init (synthetic; shapes match nn.Linear(D, D)
    # with bias and LayerNorm(D)).
    weight = jax.random.normal(k_w, (D, D), dtype=jnp.float32) * (1.0 / D ** 0.5)
    bias = jax.random.normal(k_b, (D,), dtype=jnp.float32) * 0.02
    gamma = jnp.ones((D,), dtype=jnp.float32)
    beta = jnp.zeros((D,), dtype=jnp.float32)

    out = attention_output(context, input_tensor, weight, bias, gamma, beta,
                           eps=eps)
    out = jax.block_until_ready(out)

    ref = _reference(context, input_tensor, weight, bias, gamma, beta, eps=eps)
    assert out.shape == (B, S, D)
    assert jnp.allclose(out, ref, atol=1e-5, rtol=1e-5), \
        f"max err {jnp.max(jnp.abs(out - ref))}"

    print("KERNEL_OK")
</pallas_src>

<mosaic_0001>
module attributes {stable_mosaic.version = 11 : i64} {
  func.func @_attn_output_kernel(%arg0: i32, %arg1: i32, %arg2: memref<16x32xf32, #tpu.memory_space<vmem>>, %arg3: memref<32x32xf32, #tpu.memory_space<vmem>>, %arg4: memref<1x32xf32, #tpu.memory_space<vmem>>, %arg5: memref<16x32xf32, #tpu.memory_space<vmem>>, %arg6: memref<1x32xf32, #tpu.memory_space<vmem>>, %arg7: memref<1x32xf32, #tpu.memory_space<vmem>>, %arg8: memref<16x32xf32, #tpu.memory_space<vmem>>, %arg9: memref<16x32xf32, #tpu.memory_space<vmem>>) attributes {dimension_semantics = [#tpu.dimension_semantics<parallel>, #tpu.dimension_semantics<arbitrary>], iteration_bounds = array<i64: 1, 1>, scalar_prefetch = 0 : i64, scratch_operands = 1 : i64, tpu.core_type = #tpu.core_type<tc>, window_params = [{transform_indices = @transform_0, window_bounds = array<i64: 16, 32>}, {transform_indices = @transform_1, window_bounds = array<i64: 32, 32>}, {pipeline_mode = #tpu.pipeline_mode<synchronous>, transform_indices = @transform_2, window_bounds = array<i64: 1, 32>}, {transform_indices = @transform_3, window_bounds = array<i64: 16, 32>}, {pipeline_mode = #tpu.pipeline_mode<synchronous>, transform_indices = @transform_4, window_bounds = array<i64: 1, 32>}, {pipeline_mode = #tpu.pipeline_mode<synchronous>, transform_indices = @transform_5, window_bounds = array<i64: 1, 32>}, {transform_indices = @transform_6, window_bounds = array<i64: 16, 32>}]} {
    %c0_i32 = arith.constant 0 : i32
    %0 = arith.cmpi eq, %arg1, %c0_i32 : i32
    %1 = arith.extui %0 : i1 to i32
    %c0_i32_0 = arith.constant 0 : i32
    %2 = arith.cmpi ne, %1, %c0_i32_0 : i32
    scf.if %2 {
      %cst_10 = arith.constant 0.000000e+00 : f32
      %12 = vector.broadcast %cst_10 : f32 to vector<16x32xf32>
      %c0_11 = arith.constant 0 : index
      %c0_12 = arith.constant 0 : index
      %13 = vector.load %arg9[%c0_11, %c0_12] : memref<16x32xf32, #tpu.memory_space<vmem>>, vector<16x32xf32>
      tpu.vector_store %arg9[%c0_11, %c0_12], %12 {strides = array<i32>} : memref<16x32xf32, #tpu.memory_space<vmem>>, vector<16x32xf32>,
    } else {
    }
    %c0 = arith.constant 0 : index
    %c0_1 = arith.constant 0 : index
    %3 = vector.load %arg9[%c0, %c0_1] : memref<16x32xf32, #tpu.memory_space<vmem>>, vector<16x32xf32>
    %c0_2 = arith.constant 0 : index
    %c0_3 = arith.constant 0 : index
    %4 = vector.load %arg2[%c0_2, %c0_3] : memref<16x32xf32, #tpu.memory_space<vmem>>, vector<16x32xf32>
    %c0_4 = arith.constant 0 : index
    %c0_5 = arith.constant 0 : index
    %5 = vector.load %arg3[%c0_4, %c0_5] : memref<32x32xf32, #tpu.memory_space<vmem>>, vector<32x32xf32>
    %cst = arith.constant dense<0.000000e+00> : vector<16x32xf32>
    %6 = tpu.matmul %4, %5, %cst {dimension_numbers = #tpu.dot_dimension_numbers<[1], [1], [0], [0], [0, 0, 1, 0], [], []>} : vector<16x32xf32>, vector<32x32xf32>, vector<16x32xf32> -> vector<16x32xf32>
    %7 = arith.addf %3, %6 : vector<16x32xf32>
    %c0_6 = arith.constant 0 : index
    %c0_7 = arith.constant 0 : index
    %8 = vector.load %arg9[%c0_6, %c0_7] : memref<16x32xf32, #tpu.memory_space<vmem>>, vector<16x32xf32>
    tpu.vector_store %arg9[%c0_6, %c0_7], %7 {strides = array<i32>} : memref<16x32xf32, #tpu.memory_space<vmem>>, vector<16x32xf32>,
    %c0_i32_8 = arith.constant 0 : i32
    %9 = arith.cmpi eq, %arg1, %c0_i32_8 : i32
    %10 = arith.extui %9 : i1 to i32
    %c0_i32_9 = arith.constant 0 : i32
    %11 = arith.cmpi ne, %10, %c0_i32_9 : i32
    scf.if %11 {
      %c0_10 = arith.constant 0 : index
      %c0_11 = arith.constant 0 : index
      %12 = vector.load %arg9[%c0_10, %c0_11] : memref<16x32xf32, #tpu.memory_space<vmem>>, vector<16x32xf32>
      %c0_12 = arith.constant 0 : index
      %c0_13 = arith.constant 0 : index
      %13 = vector.load %arg4[%c0_12, %c0_13] : memref<1x32xf32, #tpu.memory_space<vmem>>, vector<1x32xf32>
      %c0_14 = arith.constant 0 : index
      %c0_15 = arith.constant 0 : index
      %14 = vector.load %arg5[%c0_14, %c0_15] : memref<16x32xf32, #tpu.memory_space<vmem>>, vector<16x32xf32>
      %15 = vector.broadcast %13 : vector<1x32xf32> to vector<16x32xf32>
      %16 = arith.addf %15, %14 : vector<16x32xf32>
      %17 = arith.addf %12, %16 : vector<16x32xf32>
      %cst_16 = arith.constant dense<0.000000e+00> : vector<16xf32>
      %18 = vector.multi_reduction <add>, %17, %cst_16 [1] : vector<16x32xf32> to vector<16xf32>
      %19 = vector.shape_cast %18 : vector<16xf32> to vector<16x1xf32>
      %cst_17 = arith.constant 3.200000e+01 : f32
      %20 = vector.broadcast %cst_17 : f32 to vector<16x1xf32>
      %21 = arith.divf %19, %20 : vector<16x1xf32>
      %22 = vector.broadcast %21 : vector<16x1xf32> to vector<16x32xf32>
      %23 = arith.subf %17, %22 : vector<16x32xf32>
      %24 = arith.mulf %23, %23 : vector<16x32xf32>
      %cst_18 = arith.constant dense<0.000000e+00> : vector<16xf32>
      %25 = vector.multi_reduction <add>, %24, %cst_18 [1] : vector<16x32xf32> to vector<16xf32>
      %26 = vector.shape_cast %25 : vector<16xf32> to vector<16x1xf32>
      %cst_19 = arith.constant 3.200000e+01 : f32
      %27 = vector.broadcast %cst_19 : f32 to vector<16x1xf32>
      %28 = arith.divf %26, %27 : vector<16x1xf32>
      %cst_20 = arith.constant 9.99999996E-13 : f32
      %29 = vector.broadcast %cst_20 : f32 to vector<16x1xf32>
      %30 = arith.addf %28, %29 : vector<16x1xf32>
      %31 = math.rsqrt %30 : vector<16x1xf32>
      %32 = vector.broadcast %31 : vector<16x1xf32> to vector<16x32xf32>
      %33 = arith.mulf %23, %32 : vector<16x32xf32>
      %c0_21 = arith.constant 0 : index
      %c0_22 = arith.constant 0 : index
      %34 = vector.load %arg6[%c0_21, %c0_22] : memref<1x32xf32, #tpu.memory_space<vmem>>, vector<1x32xf32>
      %35 = vector.broadcast %34 : vector<1x32xf32> to vector<16x32xf32>
      %36 = arith.mulf %33, %35 : vector<16x32xf32>
      %c0_23 = arith.constant 0 : index
      %c0_24 = arith.constant 0 : index
      %37 = vector.load %arg7[%c0_23, %c0_24] : memref<1x32xf32, #tpu.memory_space<vmem>>, vector<1x32xf32>
      %38 = vector.broadcast %37 : vector<1x32xf32> to vector<16x32xf32>
      %39 = arith.addf %36, %38 : vector<16x32xf32>
      %c0_25 = arith.constant 0 : index
      %c0_26 = arith.constant 0 : index
      %40 = vector.load %arg8[%c0_25, %c0_26] : memref<16x32xf32, #tpu.memory_space<vmem>>, vector<16x32xf32>
      tpu.vector_store %arg8[%c0_25, %c0_26], %39 {strides = array<i32>} : memref<16x32xf32, #tpu.memory_space<vmem>>, vector<16x32xf32>,
    } else {
    }
    return
  }
  func.func @transform_0(%arg0: i32, %arg1: i32) -> (i32, i32) {
    %c0_i32 = arith.constant 0 : i32
    return %arg0, %arg1 : i32, i32
  }
  func.func @transform_1(%arg0: i32, %arg1: i32) -> (i32, i32) {
    %c0_i32 = arith.constant 0 : i32
    %c0_i32_0 = arith.constant 0 : i32
    return %c0_i32, %arg1 : i32, i32
  }
  func.func @transform_2(%arg0: i32, %arg1: i32) -> (i32, i32) {
    %c0_i32 = arith.constant 0 : i32
    %c0_i32_0 = arith.constant 0 : i32
    %c0_i32_1 = arith.constant 0 : i32
    return %c0_i32, %c0_i32_0 : i32, i32
  }
  func.func @transform_3(%arg0: i32, %arg1: i32) -> (i32, i32) {
    %c0_i32 = arith.constant 0 : i32
    %c0_i32_0 = arith.constant 0 : i32
    return %arg0, %c0_i32 : i32, i32
  }
  func.func @transform_4(%arg0: i32, %arg1: i32) -> (i32, i32) {
    %c0_i32 = arith.constant 0 : i32
    %c0_i32_0 = arith.constant 0 : i32
    %c0_i32_1 = arith.constant 0 : i32
    return %c0_i32, %c0_i32_0 : i32, i32
  }
  func.func @transform_5(%arg0: i32, %arg1: i32) -> (i32, i32) {
    %c0_i32 = arith.constant 0 : i32
    %c0_i32_0 = arith.constant 0 : i32
    %c0_i32_1 = arith.constant 0 : i32
    return %c0_i32, %c0_i32_0 : i32, i32
  }
  func.func @transform_6(%arg0: i32, %arg1: i32) -> (i32, i32) {
    %c0_i32 = arith.constant 0 : i32
    %c0_i32_0 = arith.constant 0 : i32
    return %arg0, %c0_i32 : i32, i32
  }
}

</mosaic_0001>

<llo_original>
// kernel: tpu_custom_call.1
$region0: #{tpu_custom_call.1}
  #allocation0 [shape = 'u32[]', space=smem, size = 0x4, offset = 0x4, fixed_abs, tag = 'smem constant byte address 0x4 - core index']
  #allocation1 [shape = 'u32[144,128]{1,0:T(1,128)}', space=vmem, size = 0x12000, scoped, tag = 'internal scratch']
  #allocation2 [shape = 'f32[16,32]{1,0:T(8,128)}', space=vmem, size = 0x2000, scoped, tag = 'scratch operand']
  %s0 = inlined_call_operand.hbm [shape: f32[16,32], index: 0, kind: input, shape index: {}]
  %s1 = inlined_call_operand.hbm [shape: f32[32,32], index: 1, kind: input, shape index: {}]
  %s2 = inlined_call_operand.vmem [shape: f32[1,32], index: 2, kind: input, shape index: {}]
  %s3 = inlined_call_operand.hbm [shape: f32[16,32], index: 3, kind: input, shape index: {}]
  %s4 = inlined_call_operand.vmem [shape: f32[1,32], index: 4, kind: input, shape index: {}]
  %s5 = inlined_call_operand.vmem [shape: f32[1,32], index: 5, kind: input, shape index: {}]
  %s6 = inlined_call_operand.hbm [shape: f32[16,32], index: 6, kind: output, shape index: {}]
  %s7 = sld [smem:[#allocation0]]
  $region54: #{tpu_custom_call.1} parent=0
    _
  %s9 = ssub.s32 1, %s7
  %s10 = scalar_select 0, %s9, %s7
  $region1: #{tpu_custom_call.1} parent=0
    #allocation3 [shape = 'u8[8192]{0}', space=vmem, size = 0x2000, scoped, tag = 'input window, operand 0, single buffered']
    #allocation4 [shape = 's32[1]{0}', space=sflag, size = 0x4, scoped, tag = 'scoped memory for tpu_custom_call.1']
    #allocation5 [shape = 's32[1]{0}', space=sflag, size = 0x4, scoped, tag = 'scoped memory for tpu_custom_call.1']
    #allocation6 [shape = 'u8[16384]{0}', space=vmem, size = 0x4000, scoped, tag = 'input window, operand 1, single buffered']
    #allocation7 [shape = 's32[1]{0}', space=sflag, size = 0x4, scoped, tag = 'scoped memory for tpu_custom_call.1']
    #allocation8 [shape = 'u8[8192]{0}', space=vmem, size = 0x2000, scoped, tag = 'input window, operand 3, single buffered']
    #allocation9 [shape = 'u8[8192]{0}', space=vmem, size = 0x2000, scoped, tag = 'output window, operand 0, single buffered']
    %11 = vsyncpa [#allocation4], 0
    %12 = vsyncpa [#allocation7], 0
    %13 = vsyncpa [#allocation5], 0
    // Predicated region
    $region2: #{tpu_custom_call.1} parent=1 // pred_check
      _
    $region3: #{tpu_custom_call.1} parent=1 // pred_check_branch
      %15 = sbr.rel (0) target = $region5
    $region4: #{tpu_custom_call.1} parent=1 // pred_region
      %s17 = ssub.s32 256, 256
      %18 = vsyncadd [#allocation4], %s17
      %s19 = sshll.u32 [#allocation3], 4
      %s20 = int_to_ptr.vmem [resolvable:$true] %s19
      %25 = dma.hbm_to_vmem [thread:$0]  %s0, 256, %s20, [#allocation4], 128, 128, 8
    $region5: #{tpu_custom_call.1} parent=1 // pred_fallthru
      _
    // Predicated region
    $region6: #{tpu_custom_call.1} parent=1 // pred_check
      _
    $region7: #{tpu_custom_call.1} parent=1 // pred_check_branch
      %27 = sbr.rel (0) target = $region9
    $region8: #{tpu_custom_call.1} parent=1 // pred_region
      %s29 = ssub.s32 512, 512
      %30 = vsyncadd [#allocation7], %s29
      %s31 = sshll.u32 [#allocation6], 4
      %s32 = int_to_ptr.vmem [resolvable:$true] %s31
      %37 = dma.hbm_to_vmem [thread:$0]  %s1, 512, %s32, [#allocation7], 128, 128, 8
    $region9: #{tpu_custom_call.1} parent=1 // pred_fallthru
      _
    // Predicated region
    $region10: #{tpu_custom_call.1} parent=1 // pred_check
      _
    $region11: #{tpu_custom_call.1} parent=1 // pred_check_branch
      %39 = sbr.rel (0) target = $region13
    $region12: #{tpu_custom_call.1} parent=1 // pred_region
      _
    $region13: #{tpu_custom_call.1} parent=1 // pred_fallthru
      _
    // Predicated region
    $region14: #{tpu_custom_call.1} parent=1 // pred_check
      _
    $region15: #{tpu_custom_call.1} parent=1 // pred_check_branch
      %41 = sbr.rel (0) target = $region17
    $region16: #{tpu_custom_call.1} parent=1 // pred_region
      %s43 = ssub.s32 256, 256
      %44 = vsyncadd [#allocation7], %s43
      %s45 = sshll.u32 [#allocation8], 4
      %s46 = int_to_ptr.vmem [resolvable:$true] %s45
      %51 = dma.hbm_to_vmem [thread:$0]  %s3, 256, %s46, [#allocation7], 128, 128, 8
    $region17: #{tpu_custom_call.1} parent=1 // pred_fallthru
      _
    // Predicated region
    $region18: #{tpu_custom_call.1} parent=1 // pred_check
      _
    $region19: #{tpu_custom_call.1} parent=1 // pred_check_branch
      %53 = sbr.rel (0) target = $region21
    $region20: #{tpu_custom_call.1} parent=1 // pred_region
      _
    $region21: #{tpu_custom_call.1} parent=1 // pred_fallthru
      _
    // Predicated region
    $region22: #{tpu_custom_call.1} parent=1 // pred_check
      _
    $region23: #{tpu_custom_call.1} parent=1 // pred_check_branch
      %55 = sbr.rel (0) target = $region25
    $region24: #{tpu_custom_call.1} parent=1 // pred_region
      _
    $region25: #{tpu_custom_call.1} parent=1 // pred_fallthru
      _
    // Predicated region
    $region26: #{tpu_custom_call.1} parent=1 // pred_check
      _
    $region27: #{tpu_custom_call.1} parent=1 // pred_check_branch
      %57 = sbr.rel (0) target = $region29
    $region28: #{tpu_custom_call.1} parent=1 // pred_region
      %58 = dma.done [#allocation4], 256
    $region29: #{tpu_custom_call.1} parent=1 // pred_fallthru
      _
    // Predicated region
    $region30: #{tpu_custom_call.1} parent=1 // pred_check
      _
    $region31: #{tpu_custom_call.1} parent=1 // pred_check_branch
      %60 = sbr.rel (0) target = $region33
    $region32: #{tpu_custom_call.1} parent=1 // pred_region
      %61 = dma.done [#allocation7], 512
    $region33: #{tpu_custom_call.1} parent=1 // pred_fallthru
      _
    // Predicated region
    $region34: #{tpu_custom_call.1} parent=1 // pred_check
      _
    $region35: #{tpu_custom_call.1} parent=1 // pred_check_branch
      %63 = sbr.rel (0) target = $region37
    $region36: #{tpu_custom_call.1} parent=1 // pred_region
      %64 = dma.done [#allocation7], 256
    $region37: #{tpu_custom_call.1} parent=1 // pred_fallthru
      _
    %p65 = scmp.eq.s32.totalorder 0, 0
    // Predicated region
    $region38: #{tpu_custom_call.1} parent=1 // pred_check
      %p66 = pneg %p65
    $region39: #{tpu_custom_call.1} parent=1 // pred_check_branch
      %68 = sbr.rel (%p66) target = $region41
    $region40: #{tpu_custom_call.1} parent=1 // pred_region
      %vm69 = vcmask 261120
      %70 = vst.msk [vmem:[#allocation2] sm:$0xff] %vm69, 0.0
      %71 = vst.msk [vmem:[#allocation2 + $0x8] sm:$0xff] %vm69, 0.0
    $region41: #{tpu_custom_call.1} parent=1 // pred_fallthru
      _
    %v72 = vld [vmem:[#allocation2] sm:$0xff]
    %v73 = vld [vmem:[#allocation2 + $0x8] sm:$0xff]
    %v74 = vld [vmem:[#allocation3] sm:$0xff]
    %v75 = vld [vmem:[#allocation3 + $0x8] sm:$0xff]
    %v76 = vld [vmem:[#allocation6] sm:$0xff]
    %v77 = vld [vmem:[#allocation6 + $0x8] sm:$0xff]
    %v78 = vld [vmem:[#allocation6 + $0x10] sm:$0xff]
    %v79 = vld [vmem:[#allocation6 + $0x18] sm:$0xff]
    %vm80 = vcmask 261120
    %v82 = vsel %vm80, %v74, 0
    %v85 = vsel %vm80, %v75, 0
    %v88 = vsel %vm80, %v76, 0
    %v91 = vsel %vm80, %v77, 0
    %v94 = vsel %vm80, %v78, 0
    %v97 = vsel %vm80, %v79, 0
    %99 = vmatprep.subr.mxu0 0.0
    %100 = vmatpush1.xpose.msra.mxu0 0.0
    %101 = vmatprep.subr.mxu0 0.0
    %102 = vmatpush1.xpose.msra.mxu0 0.0
    %103 = vmatprep.subr.mxu0 0.0
    %104 = vmatpush1.xpose.msra.mxu0 0.0
    %105 = vmatprep.subr.mxu0 0.0
    %106 = vmatpush1.xpose.msra.mxu0 0.0
    %107 = vmatprep.subr.mxu0 0.0
    %108 = vmatpush1.xpose.msra.mxu0 0.0
    %109 = vmatprep.subr.mxu0 0.0
    %110 = vmatpush1.xpose.msra.mxu0 0.0
    %111 = vmatprep.subr.mxu0 0.0
    %112 = vmatpush1.xpose.msra.mxu0 0.0
    %113 = vmatprep.subr.mxu0 0.0
    %114 = vmatpush1.xpose.msra.mxu0 0.0
    %115 = vmatprep.subr.mxu0 0.0
    %116 = vmatpush1.xpose.msra.mxu0 0.0
    %117 = vmatprep.subr.mxu0 0.0
    %118 = vmatpush1.xpose.msra.mxu0 0.0
    %119 = vmatprep.subr.mxu0 0.0
    %120 = vmatpush1.xpose.msra.mxu0 0.0
    %121 = vmatprep.subr.mxu0 0.0
    %122 = vmatpush1.xpose.msra.mxu0 0.0
    %123 = vmatprep.subr.mxu0 0.0
    %124 = vmatpush1.xpose.msra.mxu0 %v97
    %125 = vmatprep.subr.mxu0 0.0
    %126 = vmatpush1.xpose.msra.mxu0 %v94
    %127 = vmatprep.subr.mxu0 0.0
    %128 = vmatpush1.xpose.msra.mxu0 %v91
    %129 = vmatprep.subr.mxu0 0.0
    %130 = vmatpush1.xpose.msra.mxu0 %v88
    %131 = vmatprep.subr.mxu0 0.0
    %132 = vmatpush2.xpose.msra.mxu0 0.0
    %133 = vmatprep.subr.mxu0 0.0
    %134 = vmatpush2.xpose.msra.mxu0 0.0
    %135 = vmatprep.subr.mxu0 0.0
    %136 = vmatpush2.xpose.msra.mxu0 0.0
    %137 = vmatprep.subr.mxu0 0.0
    %138 = vmatpush2.xpose.msra.mxu0 0.0
    %139 = vmatprep.subr.mxu0 0.0
    %140 = vmatpush2.xpose.msra.mxu0 0.0
    %141 = vmatprep.subr.mxu0 0.0
    %142 = vmatpush2.xpose.msra.mxu0 0.0
    %143 = vmatprep.subr.mxu0 0.0
    %144 = vmatpush2.xpose.msra.mxu0 0.0
    %145 = vmatprep.subr.mxu0 0.0
    %146 = vmatpush2.xpose.msra.mxu0 0.0
    %147 = vmatprep.subr.mxu0 0.0
    %148 = vmatpush2.xpose.msra.mxu0 0.0
    %149 = vmatprep.subr.mxu0 0.0
    %150 = vmatpush2.xpose.msra.mxu0 0.0
    %151 = vmatprep.subr.mxu0 0.0
    %152 = vmatpush2.xpose.msra.mxu0 0.0
    %153 = vmatprep.subr.mxu0 0.0
    %154 = vmatpush2.xpose.msra.mxu0 0.0
    %155 = vmatprep.subr.mxu0 0.0
    %156 = vmatpush2.xpose.msra.mxu0 0.0
    %157 = vmatprep.subr.mxu0 0.0
    %158 = vmatpush2.xpose.msra.mxu0 0.0
    %159 = vmatprep.subr.mxu0 0.0
    %160 = vmatpush2.xpose.msra.mxu0 0.0
    %161 = vmatprep.subr.mxu0 0.0
    %162 = vmatpush2.xpose.msra.mxu0 0.0
    %163 = vmatprep.mubr.f32.mxu0 0.0
    %164 = vmatmul.mubr.f32.gmra.mxu0 %v82
    %v165 = vpop.f32.mrf.mxu0
    %v166 = vadd.f32 0.0, %v165
    %v167 = vpop.f32.mrf.mxu0
    %168 = vmatprep.mubr.f32.mxu0 0.0
    %169 = vmatmul.mubr.f32.gmra.mxu0 %v85
    %v170 = vpop.f32.mrf.mxu0
    %v171 = vadd.f32 0.0, %v170
    %v172 = vpop.f32.mrf.mxu0
    %173 = vdwg.mxu0
    %v174 = vadd.f32 %v72, %v166
    %v175 = vadd.f32 %v73, %v171
    %176 = vst.msk [vmem:[#allocation2] sm:$0xff] %vm80, %v174
    %177 = vst.msk [vmem:[#allocation2 + $0x8] sm:$0xff] %vm80, %v175
    // Predicated region
    $region42: #{tpu_custom_call.1} parent=1 // pred_check
      %p178 = pneg %p65
    $region43: #{tpu_custom_call.1} parent=1 // pred_check_branch
      %180 = sbr.rel (%p178) target = $region45
    $region44: #{tpu_custom_call.1} parent=1 // pred_region
      %v181 = vld [vmem:[#allocation2] sm:$0xff]
      %v182 = vld [vmem:[#allocation2 + $0x8] sm:$0xff]
      %v183 = vld [vmem:[%s2] sm:$0x1]
      %v184 = vld [vmem:[#allocation8] sm:$0xff]
      %v185 = vld [vmem:[#allocation8 + $0x8] sm:$0xff]
      %v187 = vlaneseq
      %v188 = vshrl.u32 %v187, 7
      %v189 = vsub.s32 0, %v188
      %v190 = vrot.slane %v183, %v189
      %v192 = vadd.f32 %v190, %v184
      %v193 = vadd.f32 %v190, %v185
      %v194 = vadd.f32 %v181, %v192
      %v195 = vadd.f32 %v182, %v193
      %v196 = vsel %vm80, %v194, 0.0
      %197 = vadd.xlane.f32.xlu0 %v196
      %v198 = vpop.xlane.xlu0 %197
      %v199 = vsel %vm80, %v195, 0.0
      %200 = vadd.xlane.f32.xlu0 %v199
      %v201 = vpop.xlane.xlu0 %200
      %v202 = vrcp.pop 32.0
      %v203 = vmul.f32 %v198, %v202
      %v204 = vmul.f32 %v201, %v202
      %v205 = vsub.f32 %v194, %v203
      %v206 = vsub.f32 %v195, %v204
      %v207 = vmul.f32 %v205, %v205
      %v208 = vmul.f32 %v206, %v206
      %v209 = vsel %vm80, %v207, 0.0
      %210 = vadd.xlane.f32.xlu0 %v209
      %v211 = vpop.xlane.xlu0 %210
      %v212 = vsel %vm80, %v208, 0.0
      %213 = vadd.xlane.f32.xlu0 %v212
      %v214 = vpop.xlane.xlu0 %213
      %v215 = vmul.f32 %v211, %v202
      %v216 = vmul.f32 %v214, %v202
      %v217 = vadd.f32 %v215, 1e-12
      %v218 = vadd.f32 %v216, 1e-12
      %v219 = vrsqrt.pop %v217
      %v220 = vrsqrt.pop %v218
      %v221 = vmul.f32 %v205, %v219
      %v222 = vmul.f32 %v206, %v220
      %v223 = vld [vmem:[%s4] sm:$0x1]
      %v225 = vlaneseq
      %v226 = vshrl.u32 %v225, 7
      %v227 = vsub.s32 0, %v226
      %v228 = vrot.slane %v223, %v227
      %v230 = vmul.f32 %v221, %v228
      %v231 = vmul.f32 %v222, %v228
      %v232 = vld [vmem:[%s5] sm:$0x1]
      %v234 = vlaneseq
      %v235 = vshrl.u32 %v234, 7
      %v236 = vsub.s32 0, %v235
      %v237 = vrot.slane %v232, %v236
      %v239 = vadd.f32 %v230, %v237
      %v240 = vadd.f32 %v231, %v237
      %241 = vst.msk [vmem:[#allocation9] sm:$0xff] %vm80, %v239
      %242 = vst.msk [vmem:[#allocation9 + $0x8] sm:$0xff] %vm80, %v240
    $region45: #{tpu_custom_call.1} parent=1 // pred_fallthru
      _
    // Predicated region
    $region46: #{tpu_custom_call.1} parent=1 // pred_check
      _
    $region47: #{tpu_custom_call.1} parent=1 // pred_check_branch
      %244 = sbr.rel (0) target = $region49
    $region48: #{tpu_custom_call.1} parent=1 // pred_region
      %s246 = ssub.s32 256, 256
      %247 = vsyncadd [#allocation5], %s246
      %s248 = sshll.u32 [#allocation9], 4
      %s249 = int_to_ptr.vmem [resolvable:$true] %s248
      %254 = dma.vmem_to_hbm [thread:$0]  %s249, 256, %s6, [#allocation5], 128, 128, 8
    $region49: #{tpu_custom_call.1} parent=1 // pred_fallthru
      _
    // Predicated region
    $region50: #{tpu_custom_call.1} parent=1 // pred_check
      _
    $region51: #{tpu_custom_call.1} parent=1 // pred_check_branch
      %256 = sbr.rel (0) target = $region53
    $region52: #{tpu_custom_call.1} parent=1 // pred_region
      %257 = dma.done [#allocation5], 256
    $region53: #{tpu_custom_call.1} parent=1 // pred_fallthru
      _
    %258 = vsyncpa [#allocation4], 1
    %259 = vsyncpa [#allocation7], 1
    %260 = vsyncpa [#allocation5], 1

</llo_original>
